<compile_context>
chip_gen: v7x
topology: tpu7x:2x2x1
jax: 0.10.0
libtpu: 0.0.40
codegen_flags: <defaults>
</compile_context>

<pallas_src>
import math
import jax
import jax.numpy as jnp
from jax.experimental import pallas as pl
from jax.experimental.pallas import tpu as pltpu

dim_input = 4
dim_hidden = 6
dim_output = 2

# Large tiles amortize the ~0.35 us/step grid overhead; (4+2)*4 bytes/row means even
# 8192 rows/step is only ~0.4 MiB of double-buffered VMEM -> comfortably fits v7x too.
_DEFAULT_TILE_B = 8192
_LANE = 128


def _round_up(n, m):
    return ((n + m - 1) // m) * m


def controller_kernel(xT_ref, w1_ref, b1_ref, w2_ref, b2_ref, outT_ref):
    # xT_ref : (dim_input,  TILE_B)   lane-dense activations
    # w1_ref : (dim_hidden, dim_input)   PyTorch layout (out, in)
    # b1_ref : (dim_hidden, 1)
    # w2_ref : (dim_output, dim_hidden)
    # b2_ref : (dim_output, 1)
    # outT_ref: (dim_output, TILE_B)
    xT = xT_ref[...]
    h = jnp.dot(w1_ref[...], xT, preferred_element_type=jnp.float32) + b1_ref[...]
    h = jnp.tanh(h)                                             # EUP, f32
    y = jnp.dot(w2_ref[...], h, preferred_element_type=jnp.float32) + b2_ref[...]
    outT_ref[...] = jax.nn.sigmoid(y).astype(outT_ref.dtype)    # lane-dense store


def controller_forward(state, w1, b1, w2, b2, *, tile_b=None):
    """state: (B, dim_input) f32 -> action: (B, dim_output) f32.

    w1: (dim_hidden, dim_input), b1: (dim_hidden,)   (PyTorch nn.Linear layout)
    w2: (dim_output, dim_hidden), b2: (dim_output,)
    """
    B = state.shape[0]
    if tile_b is None:
        tile_b = min(_DEFAULT_TILE_B, _round_up(max(B, 1), _LANE))
    B_pad = _round_up(max(B, 1), tile_b)
    num_tiles = B_pad // tile_b

    # Lane-dense transposed layout; pad batch up to a multiple of the tile.
    xT = state.astype(jnp.float32).T                            # (dim_input, B)
    if B_pad != B:
        xT = jnp.pad(xT, ((0, 0), (0, B_pad - B)))
    b1c = b1.reshape(dim_hidden, 1).astype(jnp.float32)
    b2c = b2.reshape(dim_output, 1).astype(jnp.float32)
    w1f = w1.astype(jnp.float32)
    w2f = w2.astype(jnp.float32)

    grid_spec = pltpu.PrefetchScalarGridSpec(
        num_scalar_prefetch=0,
        grid=(num_tiles,),
        in_specs=[
            pl.BlockSpec((dim_input, tile_b), lambda i: (0, i)),      # activations: tiled
            pl.BlockSpec((dim_hidden, dim_input), lambda i: (0, 0)),  # weights/biases:
            pl.BlockSpec((dim_hidden, 1), lambda i: (0, 0)),          #   constant index_map,
            pl.BlockSpec((dim_output, dim_hidden), lambda i: (0, 0)), #   stay VMEM-resident
            pl.BlockSpec((dim_output, 1), lambda i: (0, 0)),
        ],
        out_specs=pl.BlockSpec((dim_output, tile_b), lambda i: (0, i)),
    )

    cost = pl.CostEstimate(
        flops=2 * B_pad * (dim_input * dim_hidden + dim_hidden * dim_output),
        transcendentals=B_pad * (dim_hidden + dim_output),
        bytes_accessed=4 * (B_pad * (dim_input + dim_output)
                            + dim_hidden * dim_input + dim_hidden
                            + dim_output * dim_hidden + dim_output),
    )

    outT = pl.pallas_call(
        controller_kernel,
        out_shape=jax.ShapeDtypeStruct((dim_output, B_pad), jnp.float32),
        grid_spec=grid_spec,
        compiler_params=pltpu.CompilerParams(
            dimension_semantics=("parallel",),   # shards batch steps across v7x's 2 TCs
        ),
        cost_estimate=cost,
    )(xT, w1f, b1c, w2f, b2c)

    # Back to the caller's (B, dim_output) row-major layout.
    return outT[:, :B].T


def init_params(key):
    """Deterministic init mimicking nn.Linear defaults: U(-1/sqrt(fan_in), 1/sqrt(fan_in)).

    Weights are stored in PyTorch layout (out_features, in_features)."""
    k1, k2, k3, k4 = jax.random.split(key, 4)
    bound1 = 1.0 / math.sqrt(dim_input)
    bound2 = 1.0 / math.sqrt(dim_hidden)
    w1 = jax.random.uniform(k1, (dim_hidden, dim_input), jnp.float32, -bound1, bound1)
    b1 = jax.random.uniform(k2, (dim_hidden,), jnp.float32, -bound1, bound1)
    w2 = jax.random.uniform(k3, (dim_output, dim_hidden), jnp.float32, -bound2, bound2)
    b2 = jax.random.uniform(k4, (dim_output,), jnp.float32, -bound2, bound2)
    return w1, b1, w2, b2


def _reference(state, w1, b1, w2, b2):
    # Pure-JAX reference, identical math to PyTorch: x @ W.T + b per layer.
    h = jnp.tanh(state @ w1.T + b1)
    return jax.nn.sigmoid(h @ w2.T + b2)


if __name__ == "__main__":
    key = jax.random.PRNGKey(0)
    pkey, xkey1, xkey2 = jax.random.split(key, 3)
    w1, b1, w2, b2 = init_params(pkey)

    # Small primary test (batch=8). NOTE: for genuinely tiny batches the per-call grid
    # overhead dominates; this kernel pays off when batching many controller calls.
    batch = 8
    state = jax.random.normal(xkey1, (batch, dim_input), jnp.float32)
    action = controller_forward(state, w1, b1, w2, b2)
    jax.block_until_ready(action)
    ref = _reference(state, w1, b1, w2, b2)
    assert action.shape == (batch, dim_output)
    assert jnp.allclose(action, ref, atol=1e-5, rtol=1e-5)

    # Second check: batch not a multiple of the tile, exercises padding + multi-step grid.
    batch2 = 333
    state2 = jax.random.normal(xkey2, (batch2, dim_input), jnp.float32)
    action2 = controller_forward(state2, w1, b1, w2, b2, tile_b=128)
    jax.block_until_ready(action2)
    ref2 = _reference(state2, w1, b1, w2, b2)
    assert action2.shape == (batch2, dim_output)
    assert jnp.allclose(action2, ref2, atol=1e-5, rtol=1e-5)

    print("KERNEL_OK")
</pallas_src>

<mosaic_0001>
module attributes {stable_mosaic.version = 11 : i64} {
  func.func @controller_kernel(%arg0: i32, %arg1: memref<4x128xf32, #tpu.memory_space<vmem>>, %arg2: memref<6x4xf32, #tpu.memory_space<vmem>>, %arg3: memref<6x1xf32, #tpu.memory_space<vmem>>, %arg4: memref<2x6xf32, #tpu.memory_space<vmem>>, %arg5: memref<2x1xf32, #tpu.memory_space<vmem>>, %arg6: memref<2x128xf32, #tpu.memory_space<vmem>>) attributes {dimension_semantics = [#tpu.dimension_semantics<parallel>], iteration_bounds = array<i64: 1>, scalar_prefetch = 0 : i64, scratch_operands = 0 : i64, tpu.core_type = #tpu.core_type<tc>, window_params = [{transform_indices = @transform_0, window_bounds = array<i64: 4, 128>}, {pipeline_mode = #tpu.pipeline_mode<synchronous>, transform_indices = @transform_1, window_bounds = array<i64: 6, 4>}, {pipeline_mode = #tpu.pipeline_mode<synchronous>, transform_indices = @transform_2, window_bounds = array<i64: 6, 1>}, {pipeline_mode = #tpu.pipeline_mode<synchronous>, transform_indices = @transform_3, window_bounds = array<i64: 2, 6>}, {pipeline_mode = #tpu.pipeline_mode<synchronous>, transform_indices = @transform_4, window_bounds = array<i64: 2, 1>}, {transform_indices = @transform_5, window_bounds = array<i64: 2, 128>}]} {
    %c0 = arith.constant 0 : index
    %c0_0 = arith.constant 0 : index
    %0 = vector.load %arg1[%c0, %c0_0] : memref<4x128xf32, #tpu.memory_space<vmem>>, vector<4x128xf32>
    %c0_1 = arith.constant 0 : index
    %c0_2 = arith.constant 0 : index
    %1 = vector.load %arg2[%c0_1, %c0_2] : memref<6x4xf32, #tpu.memory_space<vmem>>, vector<6x4xf32>
    %cst = arith.constant dense<0.000000e+00> : vector<6x128xf32>
    %2 = tpu.matmul %1, %0, %cst {dimension_numbers = #tpu.dot_dimension_numbers<[1], [0], [0], [1], [0, 0, 1, 1], [], []>} : vector<6x4xf32>, vector<4x128xf32>, vector<6x128xf32> -> vector<6x128xf32>
    %c0_3 = arith.constant 0 : index
    %c0_4 = arith.constant 0 : index
    %3 = vector.load %arg3[%c0_3, %c0_4] : memref<6x1xf32, #tpu.memory_space<vmem>>, vector<6x1xf32>
    %4 = vector.broadcast %3 : vector<6x1xf32> to vector<6x128xf32>
    %5 = arith.addf %2, %4 : vector<6x128xf32>
    %6 = math.tanh %5 : vector<6x128xf32>
    %c0_5 = arith.constant 0 : index
    %c0_6 = arith.constant 0 : index
    %7 = vector.load %arg4[%c0_5, %c0_6] : memref<2x6xf32, #tpu.memory_space<vmem>>, vector<2x6xf32>
    %cst_7 = arith.constant dense<0.000000e+00> : vector<2x128xf32>
    %8 = tpu.matmul %7, %6, %cst_7 {dimension_numbers = #tpu.dot_dimension_numbers<[1], [0], [0], [1], [0, 0, 1, 1], [], []>} : vector<2x6xf32>, vector<6x128xf32>, vector<2x128xf32> -> vector<2x128xf32>
    %c0_8 = arith.constant 0 : index
    %c0_9 = arith.constant 0 : index
    %9 = vector.load %arg5[%c0_8, %c0_9] : memref<2x1xf32, #tpu.memory_space<vmem>>, vector<2x1xf32>
    %10 = vector.broadcast %9 : vector<2x1xf32> to vector<2x128xf32>
    %11 = arith.addf %8, %10 : vector<2x128xf32>
    %12 = arith.negf %11 : vector<2x128xf32>
    %13 = math.exp %12 : vector<2x128xf32>
    %cst_10 = arith.constant 1.000000e+00 : f32
    %14 = vector.broadcast %cst_10 : f32 to vector<2x128xf32>
    %15 = arith.addf %14, %13 : vector<2x128xf32>
    %16 = arith.divf %14, %15 : vector<2x128xf32>
    %c0_11 = arith.constant 0 : index
    %c0_12 = arith.constant 0 : index
    %17 = vector.load %arg6[%c0_11, %c0_12] : memref<2x128xf32, #tpu.memory_space<vmem>>, vector<2x128xf32>
    tpu.vector_store %arg6[%c0_11, %c0_12], %16 {strides = array<i32>} : memref<2x128xf32, #tpu.memory_space<vmem>>, vector<2x128xf32>,
    return
  }
  func.func @transform_0(%arg0: i32) -> (i32, i32) {
    %c0_i32 = arith.constant 0 : i32
    %c0_i32_0 = arith.constant 0 : i32
    return %c0_i32, %arg0 : i32, i32
  }
  func.func @transform_1(%arg0: i32) -> (i32, i32) {
    %c0_i32 = arith.constant 0 : i32
    %c0_i32_0 = arith.constant 0 : i32
    %c0_i32_1 = arith.constant 0 : i32
    return %c0_i32, %c0_i32_0 : i32, i32
  }
  func.func @transform_2(%arg0: i32) -> (i32, i32) {
    %c0_i32 = arith.constant 0 : i32
    %c0_i32_0 = arith.constant 0 : i32
    %c0_i32_1 = arith.constant 0 : i32
    return %c0_i32, %c0_i32_0 : i32, i32
  }
  func.func @transform_3(%arg0: i32) -> (i32, i32) {
    %c0_i32 = arith.constant 0 : i32
    %c0_i32_0 = arith.constant 0 : i32
    %c0_i32_1 = arith.constant 0 : i32
    return %c0_i32, %c0_i32_0 : i32, i32
  }
  func.func @transform_4(%arg0: i32) -> (i32, i32) {
    %c0_i32 = arith.constant 0 : i32
    %c0_i32_0 = arith.constant 0 : i32
    %c0_i32_1 = arith.constant 0 : i32
    return %c0_i32, %c0_i32_0 : i32, i32
  }
  func.func @transform_5(%arg0: i32) -> (i32, i32) {
    %c0_i32 = arith.constant 0 : i32
    %c0_i32_0 = arith.constant 0 : i32
    return %c0_i32, %arg0 : i32, i32
  }
}

</mosaic_0001>

<llo_original>
// kernel: tpu_custom_call.1
$region0: #{tpu_custom_call.1}
  #allocation0 [shape = 'u32[]', space=smem, size = 0x4, offset = 0x4, fixed_abs, tag = 'smem constant byte address 0x4 - core index']
  #allocation1 [shape = 'u32[144,128]{1,0:T(1,128)}', space=vmem, size = 0x12000, scoped, tag = 'internal scratch']
  %s0 = inlined_call_operand.vmem [shape: f32[4,128], index: 0, kind: input, shape index: {}]
  %s1 = inlined_call_operand.vmem [shape: f32[6,4], index: 1, kind: input, shape index: {}]
  %s2 = inlined_call_operand.vmem [shape: f32[6,1], index: 2, kind: input, shape index: {}]
  %s3 = inlined_call_operand.vmem [shape: f32[2,6], index: 3, kind: input, shape index: {}]
  %s4 = inlined_call_operand.vmem [shape: f32[2,1], index: 4, kind: input, shape index: {}]
  %s5 = inlined_call_operand.hbm [shape: f32[2,128], index: 5, kind: output, shape index: {}]
  %s6 = sld [smem:[#allocation0]]
  $region30: #{tpu_custom_call.1} parent=0
    _
  %s8 = ssub.s32 1, %s6
  %s9 = scalar_select 0, %s8, %s6
  $region1: #{tpu_custom_call.1} parent=0
    #allocation2 [shape = 'u8[1024]{0}', space=vmem, size = 0x400, scoped, tag = 'output window, operand 0, single buffered']
    #allocation3 [shape = 's32[1]{0}', space=sflag, size = 0x4, scoped, tag = 'scoped memory for tpu_custom_call.1']
    %10 = vsyncpa [#allocation3], 0
    // Predicated region
    $region2: #{tpu_custom_call.1} parent=1 // pred_check
      _
    $region3: #{tpu_custom_call.1} parent=1 // pred_check_branch
      %12 = sbr.rel (0) target = $region5
    $region4: #{tpu_custom_call.1} parent=1 // pred_region
      _
    $region5: #{tpu_custom_call.1} parent=1 // pred_fallthru
      _
    // Predicated region
    $region6: #{tpu_custom_call.1} parent=1 // pred_check
      _
    $region7: #{tpu_custom_call.1} parent=1 // pred_check_branch
      %14 = sbr.rel (0) target = $region9
    $region8: #{tpu_custom_call.1} parent=1 // pred_region
      _
    $region9: #{tpu_custom_call.1} parent=1 // pred_fallthru
      _
    // Predicated region
    $region10: #{tpu_custom_call.1} parent=1 // pred_check
      _
    $region11: #{tpu_custom_call.1} parent=1 // pred_check_branch
      %16 = sbr.rel (0) target = $region13
    $region12: #{tpu_custom_call.1} parent=1 // pred_region
      _
    $region13: #{tpu_custom_call.1} parent=1 // pred_fallthru
      _
    // Predicated region
    $region14: #{tpu_custom_call.1} parent=1 // pred_check
      _
    $region15: #{tpu_custom_call.1} parent=1 // pred_check_branch
      %18 = sbr.rel (0) target = $region17
    $region16: #{tpu_custom_call.1} parent=1 // pred_region
      _
    $region17: #{tpu_custom_call.1} parent=1 // pred_fallthru
      _
    // Predicated region
    $region18: #{tpu_custom_call.1} parent=1 // pred_check
      _
    $region19: #{tpu_custom_call.1} parent=1 // pred_check_branch
      %20 = sbr.rel (0) target = $region21
    $region20: #{tpu_custom_call.1} parent=1 // pred_region
      _
    $region21: #{tpu_custom_call.1} parent=1 // pred_fallthru
      _
    %v21 = vld [vmem:[%s0] sm:$0xf]
    %v22 = vld [vmem:[%s1] sm:$0x3f]
    %v23 = vld [vmem:[%s2] sm:$0x3f]
    %25 = vset.pattern.permute.xlu0 0
    %26 = vperm.xlu0 %25, %v23
    %v27 = vpop.permute.xlu0 %26
    %vm29 = vcmask 31744
    %v31 = vsel %vm29, %v22, 0
    %vm33 = vcmask 1043456
    %v35 = vsel %vm33, %v21, 0
    %37 = vmatprep.subr.mxu0 0.0
    %38 = vmatpush1.msra.mxu0 %v35
    %39 = vmatprep.subr.mxu0 0.0
    %40 = vmatpush1.msra.mxu0 0.0
    %41 = vmatprep.subr.mxu0 0.0
    %42 = vmatpush1.msra.mxu0 0.0
    %43 = vmatprep.subr.mxu0 0.0
    %44 = vmatpush1.msra.mxu0 0.0
    %45 = vmatprep.subr.mxu0 0.0
    %46 = vmatpush1.msra.mxu0 0.0
    %47 = vmatprep.subr.mxu0 0.0
    %48 = vmatpush1.msra.mxu0 0.0
    %49 = vmatprep.subr.mxu0 0.0
    %50 = vmatpush1.msra.mxu0 0.0
    %51 = vmatprep.subr.mxu0 0.0
    %52 = vmatpush1.msra.mxu0 0.0
    %53 = vmatprep.subr.mxu0 0.0
    %54 = vmatpush1.msra.mxu0 0.0
    %55 = vmatprep.subr.mxu0 0.0
    %56 = vmatpush1.msra.mxu0 0.0
    %57 = vmatprep.subr.mxu0 0.0
    %58 = vmatpush1.msra.mxu0 0.0
    %59 = vmatprep.subr.mxu0 0.0
    %60 = vmatpush1.msra.mxu0 0.0
    %61 = vmatprep.subr.mxu0 0.0
    %62 = vmatpush1.msra.mxu0 0.0
    %63 = vmatprep.subr.mxu0 0.0
    %64 = vmatpush1.msra.mxu0 0.0
    %65 = vmatprep.subr.mxu0 0.0
    %66 = vmatpush1.msra.mxu0 0.0
    %67 = vmatprep.subr.mxu0 0.0
    %68 = vmatpush1.msra.mxu0 0.0
    %69 = vmatprep.subr.mxu0 0.0
    %70 = vmatpush1.msra.mxu0 0.0
    %71 = vmatprep.subr.mxu0 0.0
    %72 = vmatpush1.msra.mxu0 0.0
    %73 = vmatprep.subr.mxu0 0.0
    %74 = vmatpush1.msra.mxu0 0.0
    %75 = vmatprep.subr.mxu0 0.0
    %76 = vmatpush1.msra.mxu0 0.0
    %77 = vmatprep.subr.mxu0 0.0
    %78 = vmatpush1.msra.mxu0 0.0
    %79 = vmatprep.subr.mxu0 0.0
    %80 = vmatpush1.msra.mxu0 0.0
    %81 = vmatprep.subr.mxu0 0.0
    %82 = vmatpush1.msra.mxu0 0.0
    %83 = vmatprep.subr.mxu0 0.0
    %84 = vmatpush1.msra.mxu0 0.0
    %85 = vmatprep.subr.mxu0 0.0
    %86 = vmatpush1.msra.mxu0 0.0
    %87 = vmatprep.subr.mxu0 0.0
    %88 = vmatpush1.msra.mxu0 0.0
    %89 = vmatprep.subr.mxu0 0.0
    %90 = vmatpush1.msra.mxu0 0.0
    %91 = vmatprep.subr.mxu0 0.0
    %92 = vmatpush1.msra.mxu0 0.0
    %93 = vmatprep.subr.mxu0 0.0
    %94 = vmatpush1.msra.mxu0 0.0
    %95 = vmatprep.subr.mxu0 0.0
    %96 = vmatpush1.msra.mxu0 0.0
    %97 = vmatprep.subr.mxu0 0.0
    %98 = vmatpush1.msra.mxu0 0.0
    %99 = vmatprep.subr.mxu0 0.0
    %100 = vmatpush1.msra.mxu0 0.0
    %101 = vmatprep.mubr.f32.mxu0 0.0
    %102 = vmatmul.mubr.f32.gmra.mrb[0].mxu0 %v31
    %v103 = vpop.f32.mrb[0].mxu0
    %v104 = vadd.f32 %v27, %v103
    %v105 = vpop.f32.mrb[0].mxu0
    %106 = vdwg.mxu0
    %v107 = vtanh.pop %v104
    %v108 = vld [vmem:[%s3] sm:$0x3]
    %v109 = vld [vmem:[%s4] sm:$0x3]
    %111 = vset.pattern.permute.xlu0 0
    %112 = vperm.xlu0 %111, %v109
    %v113 = vpop.permute.xlu0 %112
    %vm115 = vcmask 48128
    %v117 = vsel %vm115, %v108, 0
    %vm119 = vcmask 1045504
    %v121 = vsel %vm119, %v107, 0
    %123 = vmatprep.subr.mxu0 0.0
    %124 = vmatpush1.msra.mxu0 %v121
    %125 = vmatprep.subr.mxu0 0.0
    %126 = vmatpush1.msra.mxu0 0.0
    %127 = vmatprep.subr.mxu0 0.0
    %128 = vmatpush1.msra.mxu0 0.0
    %129 = vmatprep.subr.mxu0 0.0
    %130 = vmatpush1.msra.mxu0 0.0
    %131 = vmatprep.subr.mxu0 0.0
    %132 = vmatpush1.msra.mxu0 0.0
    %133 = vmatprep.subr.mxu0 0.0
    %134 = vmatpush1.msra.mxu0 0.0
    %135 = vmatprep.subr.mxu0 0.0
    %136 = vmatpush1.msra.mxu0 0.0
    %137 = vmatprep.subr.mxu0 0.0
    %138 = vmatpush1.msra.mxu0 0.0
    %139 = vmatprep.subr.mxu0 0.0
    %140 = vmatpush1.msra.mxu0 0.0
    %141 = vmatprep.subr.mxu0 0.0
    %142 = vmatpush1.msra.mxu0 0.0
    %143 = vmatprep.subr.mxu0 0.0
    %144 = vmatpush1.msra.mxu0 0.0
    %145 = vmatprep.subr.mxu0 0.0
    %146 = vmatpush1.msra.mxu0 0.0
    %147 = vmatprep.subr.mxu0 0.0
    %148 = vmatpush1.msra.mxu0 0.0
    %149 = vmatprep.subr.mxu0 0.0
    %150 = vmatpush1.msra.mxu0 0.0
    %151 = vmatprep.subr.mxu0 0.0
    %152 = vmatpush1.msra.mxu0 0.0
    %153 = vmatprep.subr.mxu0 0.0
    %154 = vmatpush1.msra.mxu0 0.0
    %155 = vmatprep.subr.mxu0 0.0
    %156 = vmatpush1.msra.mxu0 0.0
    %157 = vmatprep.subr.mxu0 0.0
    %158 = vmatpush1.msra.mxu0 0.0
    %159 = vmatprep.subr.mxu0 0.0
    %160 = vmatpush1.msra.mxu0 0.0
    %161 = vmatprep.subr.mxu0 0.0
    %162 = vmatpush1.msra.mxu0 0.0
    %163 = vmatprep.subr.mxu0 0.0
    %164 = vmatpush1.msra.mxu0 0.0
    %165 = vmatprep.subr.mxu0 0.0
    %166 = vmatpush1.msra.mxu0 0.0
    %167 = vmatprep.subr.mxu0 0.0
    %168 = vmatpush1.msra.mxu0 0.0
    %169 = vmatprep.subr.mxu0 0.0
    %170 = vmatpush1.msra.mxu0 0.0
    %171 = vmatprep.subr.mxu0 0.0
    %172 = vmatpush1.msra.mxu0 0.0
    %173 = vmatprep.subr.mxu0 0.0
    %174 = vmatpush1.msra.mxu0 0.0
    %175 = vmatprep.subr.mxu0 0.0
    %176 = vmatpush1.msra.mxu0 0.0
    %177 = vmatprep.subr.mxu0 0.0
    %178 = vmatpush1.msra.mxu0 0.0
    %179 = vmatprep.subr.mxu0 0.0
    %180 = vmatpush1.msra.mxu0 0.0
    %181 = vmatprep.subr.mxu0 0.0
    %182 = vmatpush1.msra.mxu0 0.0
    %183 = vmatprep.subr.mxu0 0.0
    %184 = vmatpush1.msra.mxu0 0.0
    %185 = vmatprep.subr.mxu0 0.0
    %186 = vmatpush1.msra.mxu0 0.0
    %187 = vmatprep.mubr.f32.mxu0 0.0
    %188 = vmatmul.mubr.f32.gmra.mrb[0].mxu0 %v117
    %v189 = vpop.f32.mrb[0].mxu0
    %v190 = vadd.f32 %v113, %v189
    %v191 = vpop.f32.mrb[0].mxu0
    %192 = vdwg.mxu0
    %v193 = vxor.u32 %v190, 2147483648
    %v194 = vmul.f32 %v193, 1.442695
    %v195 = vpow.pop %v194
    %v196 = vadd.f32 %v195, 1.0
    %v197 = vrcp.pop %v196
    %v198 = vmul.f32 1.0, %v197
    %199 = vst [vmem:[#allocation2] sm:$0x3] %v198
    // Predicated region
    $region22: #{tpu_custom_call.1} parent=1 // pred_check
      _
    $region23: #{tpu_custom_call.1} parent=1 // pred_check_branch
      %201 = sbr.rel (0) target = $region25
    $region24: #{tpu_custom_call.1} parent=1 // pred_region
      %s203 = ssub.s32 32, 32
      %204 = vsyncadd [#allocation3], %s203
      %s206 = sshll.u32 [#allocation2], 4
      %s207 = int_to_ptr.vmem [resolvable:$true] %s206
      %209 = dma.vmem_to_hbm [thread:$0]  %s207, 32, %s5, [#allocation3]
    $region25: #{tpu_custom_call.1} parent=1 // pred_fallthru
      _
    // Predicated region
    $region26: #{tpu_custom_call.1} parent=1 // pred_check
      _
    $region27: #{tpu_custom_call.1} parent=1 // pred_check_branch
      %211 = sbr.rel (0) target = $region29
    $region28: #{tpu_custom_call.1} parent=1 // pred_region
      %212 = dma.done [#allocation3], 32
    $region29: #{tpu_custom_call.1} parent=1 // pred_fallthru
      _
    %213 = vsyncpa [#allocation3], 1

</llo_original>
